<compile_context>
chip_gen: v6e
topology: v6e:2x2x1
jax: 0.10.0
libtpu: 0.0.40
codegen_flags: <defaults>
</compile_context>

<pallas_src>
import functools
import math

import jax
import jax.numpy as jnp
from jax import lax
from jax.experimental import pallas as pl
from jax.experimental.pallas import tpu as pltpu

_NEG_INF = -1e30                     # large finite negative: no inf-inf -> NaN
_VMEM_LIMIT = 48 * 1024 * 1024       # explicit scoped-VMEM budget (v5e/v6e/v7x safe)


def _qkv_proj_kernel(x_ref, w_ref, b_ref, q_ref, k_ref, v_ref, *,
                     n_head, scale, compute_dtype):
    # x_ref: (1, Tq, C)   w_ref: (3C, C) torch layout   b_ref: (1, 3C) f32
    # q/k/v_ref: (1, H, Tq, D) compute_dtype
    C = x_ref.shape[2]
    D = C // n_head
    x = x_ref[0].astype(compute_dtype)                          # (Tq, C)
    # x @ W^T with W in (out, in) layout: contract C (dim 1) of both operands.
    qkv = lax.dot_general(x, w_ref[...], (((1,), (1,)), ((), ())),
                          preferred_element_type=jnp.float32)   # (Tq, 3C) f32
    qkv = qkv + b_ref[...]
    # Split heads once here (amortized over the single projection pass).
    for h in range(n_head):                                     # static, small
        q_ref[0, h] = (qkv[:, h * D:(h + 1) * D] * scale).astype(compute_dtype)
        k_ref[0, h] = qkv[:, C + h * D:C + (h + 1) * D].astype(compute_dtype)
        v_ref[0, h] = qkv[:, 2 * C + h * D:2 * C + (h + 1) * D].astype(compute_dtype)


def _flash_attn_kernel(q_ref, k_ref, v_ref, wp_ref, bp_ref, o_ref,
                       m_scr, l_scr, acc_scr, y_scr, *, compute_dtype):
    # q_ref: (1, H, Tq, D)   k_ref/v_ref: (1, H, Tk, D)
    # wp_ref: (C, C) torch layout   bp_ref: (1, C) f32   o_ref: (1, Tq, C)
    # scratch: m/l (H, Tq, 1) f32, acc (H, Tq, D) f32, y (Tq, C) f32
    qi = pl.program_id(1)
    ki = pl.program_id(2)
    H, block_q, D = q_ref.shape[1], q_ref.shape[2], q_ref.shape[3]
    block_k = k_ref.shape[2]

    @pl.when(ki == 0)
    def _init():
        m_scr[...] = jnp.full_like(m_scr, _NEG_INF)
        l_scr[...] = jnp.zeros_like(l_scr)
        acc_scr[...] = jnp.zeros_like(acc_scr)

    def _step(masked):
        q = q_ref[0]                          # (H, Tq, D), already scaled
        k = k_ref[0]
        v = v_ref[0]
        # batched over heads: (H, Tq, D) x (H, Tk, D) -> (H, Tq, Tk), f32 acc
        s = lax.dot_general(q, k, (((2,), (2,)), ((0,), (0,))),
                            preferred_element_type=jnp.float32)
        if masked:  # only the diagonal block needs the element-level mask
            q_pos = qi * block_q + lax.broadcasted_iota(
                jnp.int32, (block_q, block_k), 0)
            k_pos = ki * block_k + lax.broadcasted_iota(
                jnp.int32, (block_q, block_k), 1)
            s = jnp.where((k_pos <= q_pos)[None, :, :], s, _NEG_INF)
        m_prev = m_scr[...]
        m_new = jnp.maximum(m_prev, jnp.max(s, axis=-1, keepdims=True))
        alpha = jnp.exp(m_prev - m_new)
        p = jnp.exp(s - m_new)                                  # f32
        l_scr[...] = alpha * l_scr[...] + jnp.sum(p, axis=-1, keepdims=True)
        pv = lax.dot_general(p.astype(compute_dtype), v,
                             (((2,), (1,)), ((0,), (0,))),
                             preferred_element_type=jnp.float32)  # (H, Tq, D)
        acc_scr[...] = alpha * acc_scr[...] + pv
        m_scr[...] = m_new

    @pl.when(ki < qi)               # fully visible block: no mask work
    def _unmasked():
        _step(masked=False)

    @pl.when(ki == qi)              # diagonal block: mask, then finalize
    def _diag_and_finalize():
        _step(masked=True)
        inv_l = pl.reciprocal(l_scr[...], approx=True)          # (H, Tq, 1), EUP
        # merge heads into a lane-dense (Tq, C) slab once per q block
        for h in range(H):
            y_scr[:, h * D:(h + 1) * D] = acc_scr[h] * inv_l[h]
        y = y_scr[...].astype(compute_dtype)                    # (Tq, C)
        out = lax.dot_general(y, wp_ref[...], (((1,), (1,)), ((), ())),
                              preferred_element_type=jnp.float32)
        o_ref[0] = (out + bp_ref[...]).astype(o_ref.dtype)
    # ki > qi: fully masked -> no compute; kv index_map is clamped so no new DMA.


def causal_self_attention(x, w_attn, b_attn, w_proj, b_proj, *, n_head,
                          block_q=128, block_k=128,
                          compute_dtype=jnp.bfloat16):
    """x: (B, T, C). w_attn: (3C, C), w_proj: (C, C) in torch (out, in) layout."""
    B, T, C = x.shape
    assert C % n_head == 0
    D = C // n_head
    block_q = min(block_q, T)
    block_k = min(block_k, T)
    assert block_q == block_k, "block-level causal skipping assumes equal q/k tiles"
    assert T % block_q == 0, "T must be a multiple of the q/k block size"
    nq = T // block_q
    nk = T // block_k
    scale = 1.0 / math.sqrt(D)

    # Weights stay in torch layout (consumed via dot_general dimension_numbers);
    # only a one-time dtype cast for the MXU.  Biases are added in f32.
    w_attn_c = w_attn.astype(compute_dtype)
    w_proj_c = w_proj.astype(compute_dtype)
    b_attn_2d = b_attn.reshape(1, 3 * C).astype(jnp.float32)
    b_proj_2d = b_proj.reshape(1, C).astype(jnp.float32)

    # ---- stage 1: fused QKV projection + head split -> (B, H, T, D) ----
    qkv_kernel = functools.partial(_qkv_proj_kernel, n_head=n_head, scale=scale,
                                   compute_dtype=compute_dtype)
    q, k, v = pl.pallas_call(
        qkv_kernel,
        out_shape=(
            jax.ShapeDtypeStruct((B, n_head, T, D), compute_dtype),
            jax.ShapeDtypeStruct((B, n_head, T, D), compute_dtype),
            jax.ShapeDtypeStruct((B, n_head, T, D), compute_dtype),
        ),
        grid=(B, nq),
        in_specs=[
            pl.BlockSpec((1, block_q, C), lambda b, i: (b, i, 0)),
            pl.BlockSpec((3 * C, C), lambda b, i: (0, 0)),      # resident weight
            pl.BlockSpec((1, 3 * C), lambda b, i: (0, 0)),
        ],
        out_specs=(
            pl.BlockSpec((1, n_head, block_q, D), lambda b, i: (b, 0, i, 0)),
            pl.BlockSpec((1, n_head, block_q, D), lambda b, i: (b, 0, i, 0)),
            pl.BlockSpec((1, n_head, block_q, D), lambda b, i: (b, 0, i, 0)),
        ),
        compiler_params=pltpu.CompilerParams(
            dimension_semantics=("parallel", "parallel"),
            vmem_limit_bytes=_VMEM_LIMIT),
    )(x, w_attn_c, b_attn_2d)

    # ---- stage 2: flash attention (online softmax) + fused output projection ----
    attn_kernel = functools.partial(_flash_attn_kernel, compute_dtype=compute_dtype)
    out = pl.pallas_call(
        attn_kernel,
        out_shape=jax.ShapeDtypeStruct((B, T, C), x.dtype),
        grid=(B, nq, nk),
        in_specs=[
            pl.BlockSpec((1, n_head, block_q, D),
                         lambda b, qi, ki: (b, 0, qi, 0)),
            # clamp the kv block index to the diagonal: skipped (fully masked)
            # blocks re-use the previous block -> no DMA is issued for them.
            pl.BlockSpec((1, n_head, block_k, D),
                         lambda b, qi, ki: (b, 0, jnp.minimum(ki, qi), 0)),
            pl.BlockSpec((1, n_head, block_k, D),
                         lambda b, qi, ki: (b, 0, jnp.minimum(ki, qi), 0)),
            pl.BlockSpec((C, C), lambda b, qi, ki: (0, 0)),     # resident W_proj
            pl.BlockSpec((1, C), lambda b, qi, ki: (0, 0)),
        ],
        out_specs=pl.BlockSpec((1, block_q, C), lambda b, qi, ki: (b, qi, 0)),
        scratch_shapes=[
            pltpu.VMEM((n_head, block_q, 1), jnp.float32),      # running max m
            pltpu.VMEM((n_head, block_q, 1), jnp.float32),      # running sum l
            pltpu.VMEM((n_head, block_q, D), jnp.float32),      # output accumulator
            pltpu.VMEM((block_q, C), jnp.float32),              # lane-dense head merge
        ],
        compiler_params=pltpu.CompilerParams(
            dimension_semantics=("parallel", "parallel", "arbitrary"),
            vmem_limit_bytes=_VMEM_LIMIT),
    )(q, k, v, w_proj_c, b_proj_2d)
    return out


def reference_forward(x, w_attn, b_attn, w_proj, b_proj, *, n_head):
    """Plain-JAX (f32) replica of the PyTorch forward, for verification."""
    B, T, C = x.shape
    D = C // n_head
    qkv = x @ w_attn.T + b_attn                                  # (B, T, 3C)
    q, k, v = jnp.split(qkv, 3, axis=-1)
    q = q.reshape(B, T, n_head, D).transpose(0, 2, 1, 3)
    k = k.reshape(B, T, n_head, D).transpose(0, 2, 1, 3)
    v = v.reshape(B, T, n_head, D).transpose(0, 2, 1, 3)
    s = jnp.einsum("bhqd,bhkd->bhqk", q, k) / math.sqrt(D)
    mask = jnp.tril(jnp.ones((T, T), dtype=bool))
    s = jnp.where(mask, s, -jnp.inf)
    p = jax.nn.softmax(s, axis=-1)
    y = jnp.einsum("bhqk,bhkd->bhqd", p, v)
    y = y.transpose(0, 2, 1, 3).reshape(B, T, C)
    return y @ w_proj.T + b_proj


if __name__ == "__main__":
    # Small config consistent with the module (n_embd divisible by n_head).
    B, T, C, n_head = 2, 8, 32, 4

    key = jax.random.PRNGKey(0)
    kx, kw1, kb1, kw2, kb2 = jax.random.split(key, 5)
    bound = 1.0 / math.sqrt(C)
    w_attn = jax.random.uniform(kw1, (3 * C, C), jnp.float32, -bound, bound)
    b_attn = jax.random.uniform(kb1, (3 * C,), jnp.float32, -bound, bound)
    w_proj = jax.random.uniform(kw2, (C, C), jnp.float32, -bound, bound)
    b_proj = jax.random.uniform(kb2, (C,), jnp.float32, -bound, bound)
    x = jax.random.normal(kx, (B, T, C), jnp.float32)

    ref = reference_forward(x, w_attn, b_attn, w_proj, b_proj, n_head=n_head)

    # f32 compute path: tight check of the flash/online-softmax semantics.
    out_f32 = causal_self_attention(x, w_attn, b_attn, w_proj, b_proj,
                                    n_head=n_head, compute_dtype=jnp.float32)
    out_f32 = jax.block_until_ready(out_f32)
    assert out_f32.shape == (B, T, C)
    assert jnp.allclose(out_f32, ref, atol=1e-2, rtol=1e-2), "f32 kernel mismatch"

    # bf16 MXU path (default / optimized): looser tolerance for bf16 inputs.
    out_bf16 = causal_self_attention(x, w_attn, b_attn, w_proj, b_proj,
                                     n_head=n_head, compute_dtype=jnp.bfloat16)
    out_bf16 = jax.block_until_ready(out_bf16)
    assert out_bf16.shape == (B, T, C)
    assert jnp.allclose(out_bf16, ref, atol=5e-2, rtol=5e-2), "bf16 kernel mismatch"

    print("KERNEL_OK")
</pallas_src>

<mosaic_0001>
module attributes {stable_mosaic.version = 11 : i64} {
  func.func @_qkv_proj_kernel(%arg0: i32, %arg1: i32, %arg2: memref<1x8x32xf32, #tpu.memory_space<vmem>>, %arg3: memref<96x32xf32, #tpu.memory_space<vmem>>, %arg4: memref<1x96xf32, #tpu.memory_space<vmem>>, %arg5: memref<1x4x8x8xf32, #tpu.memory_space<vmem>>, %arg6: memref<1x4x8x8xf32, #tpu.memory_space<vmem>>, %arg7: memref<1x4x8x8xf32, #tpu.memory_space<vmem>>) attributes {dimension_semantics = [#tpu.dimension_semantics<parallel>, #tpu.dimension_semantics<parallel>], iteration_bounds = array<i64: 2, 1>, scalar_prefetch = 0 : i64, scratch_operands = 0 : i64, tpu.core_type = #tpu.core_type<tc>, window_params = [{transform_indices = @transform_0, window_bounds = array<i64: 1, 8, 32>}, {pipeline_mode = #tpu.pipeline_mode<synchronous>, transform_indices = @transform_1, window_bounds = array<i64: 96, 32>}, {pipeline_mode = #tpu.pipeline_mode<synchronous>, transform_indices = @transform_2, window_bounds = array<i64: 1, 96>}, {transform_indices = @transform_3, window_bounds = array<i64: 1, 4, 8, 8>}, {transform_indices = @transform_4, window_bounds = array<i64: 1, 4, 8, 8>}, {transform_indices = @transform_5, window_bounds = array<i64: 1, 4, 8, 8>}]} {
    %c0 = arith.constant 0 : index
    %c0_0 = arith.constant 0 : index
    %c0_1 = arith.constant 0 : index
    %0 = vector.load %arg2[%c0, %c0_0, %c0_1] : memref<1x8x32xf32, #tpu.memory_space<vmem>>, vector<1x8x32xf32>
    %1 = vector.shape_cast %0 : vector<1x8x32xf32> to vector<8x32xf32>
    %c0_2 = arith.constant 0 : index
    %c0_3 = arith.constant 0 : index
    %2 = vector.load %arg3[%c0_2, %c0_3] : memref<96x32xf32, #tpu.memory_space<vmem>>, vector<96x32xf32>
    %cst = arith.constant dense<0.000000e+00> : vector<8x96xf32>
    %3 = tpu.matmul %1, %2, %cst {dimension_numbers = #tpu.dot_dimension_numbers<[1], [1], [0], [0], [0, 0, 1, 0], [], []>} : vector<8x32xf32>, vector<96x32xf32>, vector<8x96xf32> -> vector<8x96xf32>
    %c0_4 = arith.constant 0 : index
    %c0_5 = arith.constant 0 : index
    %4 = vector.load %arg4[%c0_4, %c0_5] : memref<1x96xf32, #tpu.memory_space<vmem>>, vector<1x96xf32>
    %5 = vector.broadcast %4 : vector<1x96xf32> to vector<8x96xf32>
    %6 = arith.addf %3, %5 : vector<8x96xf32>
    %7 = vector.extract_strided_slice %6 {offsets = [0, 0], sizes = [8, 8], strides = [1, 1]} : vector<8x96xf32> to vector<8x8xf32>
    %cst_6 = arith.constant 0.353553385 : f32
    %8 = vector.broadcast %cst_6 : f32 to vector<8x8xf32>
    %9 = arith.mulf %7, %8 : vector<8x8xf32>
    %c0_7 = arith.constant 0 : index
    %c0_8 = arith.constant 0 : index
    %c0_9 = arith.constant 0 : index
    %c0_10 = arith.constant 0 : index
    %10 = vector.load %arg5[%c0_7, %c0_8, %c0_9, %c0_10] : memref<1x4x8x8xf32, #tpu.memory_space<vmem>>, vector<1x1x8x8xf32>
    %11 = vector.shape_cast %10 : vector<1x1x8x8xf32> to vector<8x8xf32>
    %12 = vector.shape_cast %9 : vector<8x8xf32> to vector<1x1x8x8xf32>
    tpu.vector_store %arg5[%c0_7, %c0_8, %c0_9, %c0_10], %12 {strides = array<i32>} : memref<1x4x8x8xf32, #tpu.memory_space<vmem>>, vector<1x1x8x8xf32>,
    %13 = vector.extract_strided_slice %6 {offsets = [0, 32], sizes = [8, 8], strides = [1, 1]} : vector<8x96xf32> to vector<8x8xf32>
    %c0_11 = arith.constant 0 : index
    %c0_12 = arith.constant 0 : index
    %c0_13 = arith.constant 0 : index
    %c0_14 = arith.constant 0 : index
    %14 = vector.load %arg6[%c0_11, %c0_12, %c0_13, %c0_14] : memref<1x4x8x8xf32, #tpu.memory_space<vmem>>, vector<1x1x8x8xf32>
    %15 = vector.shape_cast %14 : vector<1x1x8x8xf32> to vector<8x8xf32>
    %16 = vector.shape_cast %13 : vector<8x8xf32> to vector<1x1x8x8xf32>
    tpu.vector_store %arg6[%c0_11, %c0_12, %c0_13, %c0_14], %16 {strides = array<i32>} : memref<1x4x8x8xf32, #tpu.memory_space<vmem>>, vector<1x1x8x8xf32>,
    %17 = vector.extract_strided_slice %6 {offsets = [0, 64], sizes = [8, 8], strides = [1, 1]} : vector<8x96xf32> to vector<8x8xf32>
    %c0_15 = arith.constant 0 : index
    %c0_16 = arith.constant 0 : index
    %c0_17 = arith.constant 0 : index
    %c0_18 = arith.constant 0 : index
    %18 = vector.load %arg7[%c0_15, %c0_16, %c0_17, %c0_18] : memref<1x4x8x8xf32, #tpu.memory_space<vmem>>, vector<1x1x8x8xf32>
    %19 = vector.shape_cast %18 : vector<1x1x8x8xf32> to vector<8x8xf32>
    %20 = vector.shape_cast %17 : vector<8x8xf32> to vector<1x1x8x8xf32>
    tpu.vector_store %arg7[%c0_15, %c0_16, %c0_17, %c0_18], %20 {strides = array<i32>} : memref<1x4x8x8xf32, #tpu.memory_space<vmem>>, vector<1x1x8x8xf32>,
    %21 = vector.extract_strided_slice %6 {offsets = [0, 8], sizes = [8, 8], strides = [1, 1]} : vector<8x96xf32> to vector<8x8xf32>
    %cst_19 = arith.constant 0.353553385 : f32
    %22 = vector.broadcast %cst_19 : f32 to vector<8x8xf32>
    %23 = arith.mulf %21, %22 : vector<8x8xf32>
    %c0_20 = arith.constant 0 : index
    %c1 = arith.constant 1 : index
    %c0_21 = arith.constant 0 : index
    %c0_22 = arith.constant 0 : index
    %24 = vector.load %arg5[%c0_20, %c1, %c0_21, %c0_22] : memref<1x4x8x8xf32, #tpu.memory_space<vmem>>, vector<1x1x8x8xf32>
    %25 = vector.shape_cast %24 : vector<1x1x8x8xf32> to vector<8x8xf32>
    %26 = vector.shape_cast %23 : vector<8x8xf32> to vector<1x1x8x8xf32>
    tpu.vector_store %arg5[%c0_20, %c1, %c0_21, %c0_22], %26 {strides = array<i32>} : memref<1x4x8x8xf32, #tpu.memory_space<vmem>>, vector<1x1x8x8xf32>,
    %27 = vector.extract_strided_slice %6 {offsets = [0, 40], sizes = [8, 8], strides = [1, 1]} : vector<8x96xf32> to vector<8x8xf32>
    %c0_23 = arith.constant 0 : index
    %c1_24 = arith.constant 1 : index
    %c0_25 = arith.constant 0 : index
    %c0_26 = arith.constant 0 : index
    %28 = vector.load %arg6[%c0_23, %c1_24, %c0_25, %c0_26] : memref<1x4x8x8xf32, #tpu.memory_space<vmem>>, vector<1x1x8x8xf32>
    %29 = vector.shape_cast %28 : vector<1x1x8x8xf32> to vector<8x8xf32>
    %30 = vector.shape_cast %27 : vector<8x8xf32> to vector<1x1x8x8xf32>
    tpu.vector_store %arg6[%c0_23, %c1_24, %c0_25, %c0_26], %30 {strides = array<i32>} : memref<1x4x8x8xf32, #tpu.memory_space<vmem>>, vector<1x1x8x8xf32>,
    %31 = vector.extract_strided_slice %6 {offsets = [0, 72], sizes = [8, 8], strides = [1, 1]} : vector<8x96xf32> to vector<8x8xf32>
    %c0_27 = arith.constant 0 : index
    %c1_28 = arith.constant 1 : index
    %c0_29 = arith.constant 0 : index
    %c0_30 = arith.constant 0 : index
    %32 = vector.load %arg7[%c0_27, %c1_28, %c0_29, %c0_30] : memref<1x4x8x8xf32, #tpu.memory_space<vmem>>, vector<1x1x8x8xf32>
    %33 = vector.shape_cast %32 : vector<1x1x8x8xf32> to vector<8x8xf32>
    %34 = vector.shape_cast %31 : vector<8x8xf32> to vector<1x1x8x8xf32>
    tpu.vector_store %arg7[%c0_27, %c1_28, %c0_29, %c0_30], %34 {strides = array<i32>} : memref<1x4x8x8xf32, #tpu.memory_space<vmem>>, vector<1x1x8x8xf32>,
    %35 = vector.extract_strided_slice %6 {offsets = [0, 16], sizes = [8, 8], strides = [1, 1]} : vector<8x96xf32> to vector<8x8xf32>
    %cst_31 = arith.constant 0.353553385 : f32
    %36 = vector.broadcast %cst_31 : f32 to vector<8x8xf32>
    %37 = arith.mulf %35, %36 : vector<8x8xf32>
    %c0_32 = arith.constant 0 : index
    %c2 = arith.constant 2 : index
    %c0_33 = arith.constant 0 : index
    %c0_34 = arith.constant 0 : index
    %38 = vector.load %arg5[%c0_32, %c2, %c0_33, %c0_34] : memref<1x4x8x8xf32, #tpu.memory_space<vmem>>, vector<1x1x8x8xf32>
    %39 = vector.shape_cast %38 : vector<1x1x8x8xf32> to vector<8x8xf32>
    %40 = vector.shape_cast %37 : vector<8x8xf32> to vector<1x1x8x8xf32>
    tpu.vector_store %arg5[%c0_32, %c2, %c0_33, %c0_34], %40 {strides = array<i32>} : memref<1x4x8x8xf32, #tpu.memory_space<vmem>>, vector<1x1x8x8xf32>,
    %41 = vector.extract_strided_slice %6 {offsets = [0, 48], sizes = [8, 8], strides = [1, 1]} : vector<8x96xf32> to vector<8x8xf32>
    %c0_35 = arith.constant 0 : index
    %c2_36 = arith.constant 2 : index
    %c0_37 = arith.constant 0 : index
    %c0_38 = arith.constant 0 : index
    %42 = vector.load %arg6[%c0_35, %c2_36, %c0_37, %c0_38] : memref<1x4x8x8xf32, #tpu.memory_space<vmem>>, vector<1x1x8x8xf32>
    %43 = vector.shape_cast %42 : vector<1x1x8x8xf32> to vector<8x8xf32>
    %44 = vector.shape_cast %41 : vector<8x8xf32> to vector<1x1x8x8xf32>
    tpu.vector_store %arg6[%c0_35, %c2_36, %c0_37, %c0_38], %44 {strides = array<i32>} : memref<1x4x8x8xf32, #tpu.memory_space<vmem>>, vector<1x1x8x8xf32>,
    %45 = vector.extract_strided_slice %6 {offsets = [0, 80], sizes = [8, 8], strides = [1, 1]} : vector<8x96xf32> to vector<8x8xf32>
    %c0_39 = arith.constant 0 : index
    %c2_40 = arith.constant 2 : index
    %c0_41 = arith.constant 0 : index
    %c0_42 = arith.constant 0 : index
    %46 = vector.load %arg7[%c0_39, %c2_40, %c0_41, %c0_42] : memref<1x4x8x8xf32, #tpu.memory_space<vmem>>, vector<1x1x8x8xf32>
    %47 = vector.shape_cast %46 : vector<1x1x8x8xf32> to vector<8x8xf32>
    %48 = vector.shape_cast %45 : vector<8x8xf32> to vector<1x1x8x8xf32>
    tpu.vector_store %arg7[%c0_39, %c2_40, %c0_41, %c0_42], %48 {strides = array<i32>} : memref<1x4x8x8xf32, #tpu.memory_space<vmem>>, vector<1x1x8x8xf32>,
    %49 = vector.extract_strided_slice %6 {offsets = [0, 24], sizes = [8, 8], strides = [1, 1]} : vector<8x96xf32> to vector<8x8xf32>
    %cst_43 = arith.constant 0.353553385 : f32
    %50 = vector.broadcast %cst_43 : f32 to vector<8x8xf32>
    %51 = arith.mulf %49, %50 : vector<8x8xf32>
    %c0_44 = arith.constant 0 : index
    %c3 = arith.constant 3 : index
    %c0_45 = arith.constant 0 : index
    %c0_46 = arith.constant 0 : index
    %52 = vector.load %arg5[%c0_44, %c3, %c0_45, %c0_46] : memref<1x4x8x8xf32, #tpu.memory_space<vmem>>, vector<1x1x8x8xf32>
    %53 = vector.shape_cast %52 : vector<1x1x8x8xf32> to vector<8x8xf32>
    %54 = vector.shape_cast %51 : vector<8x8xf32> to vector<1x1x8x8xf32>
    tpu.vector_store %arg5[%c0_44, %c3, %c0_45, %c0_46], %54 {strides = array<i32>} : memref<1x4x8x8xf32, #tpu.memory_space<vmem>>, vector<1x1x8x8xf32>,
    %55 = vector.extract_strided_slice %6 {offsets = [0, 56], sizes = [8, 8], strides = [1, 1]} : vector<8x96xf32> to vector<8x8xf32>
    %c0_47 = arith.constant 0 : index
    %c3_48 = arith.constant 3 : index
    %c0_49 = arith.constant 0 : index
    %c0_50 = arith.constant 0 : index
    %56 = vector.load %arg6[%c0_47, %c3_48, %c0_49, %c0_50] : memref<1x4x8x8xf32, #tpu.memory_space<vmem>>, vector<1x1x8x8xf32>
    %57 = vector.shape_cast %56 : vector<1x1x8x8xf32> to vector<8x8xf32>
    %58 = vector.shape_cast %55 : vector<8x8xf32> to vector<1x1x8x8xf32>
    tpu.vector_store %arg6[%c0_47, %c3_48, %c0_49, %c0_50], %58 {strides = array<i32>} : memref<1x4x8x8xf32, #tpu.memory_space<vmem>>, vector<1x1x8x8xf32>,
    %59 = vector.extract_strided_slice %6 {offsets = [0, 88], sizes = [8, 8], strides = [1, 1]} : vector<8x96xf32> to vector<8x8xf32>
    %c0_51 = arith.constant 0 : index
    %c3_52 = arith.constant 3 : index
    %c0_53 = arith.constant 0 : index
    %c0_54 = arith.constant 0 : index
    %60 = vector.load %arg7[%c0_51, %c3_52, %c0_53, %c0_54] : memref<1x4x8x8xf32, #tpu.memory_space<vmem>>, vector<1x1x8x8xf32>
    %61 = vector.shape_cast %60 : vector<1x1x8x8xf32> to vector<8x8xf32>
    %62 = vector.shape_cast %59 : vector<8x8xf32> to vector<1x1x8x8xf32>
    tpu.vector_store %arg7[%c0_51, %c3_52, %c0_53, %c0_54], %62 {strides = array<i32>} : memref<1x4x8x8xf32, #tpu.memory_space<vmem>>, vector<1x1x8x8xf32>,
    return
  }
  func.func @transform_0(%arg0: i32, %arg1: i32) -> (i32, i32, i32) {
    %c0_i32 = arith.constant 0 : i32
    %c0_i32_0 = arith.constant 0 : i32
    return %arg0, %arg1, %c0_i32 : i32, i32, i32
  }
  func.func @transform_1(%arg0: i32, %arg1: i32) -> (i32, i32) {
    %c0_i32 = arith.constant 0 : i32
    %c0_i32_0 = arith.constant 0 : i32
    %c0_i32_1 = arith.constant 0 : i32
    return %c0_i32, %c0_i32_0 : i32, i32
  }
  func.func @transform_2(%arg0: i32, %arg1: i32) -> (i32, i32) {
    %c0_i32 = arith.constant 0 : i32
    %c0_i32_0 = arith.constant 0 : i32
    %c0_i32_1 = arith.constant 0 : i32
    return %c0_i32, %c0_i32_0 : i32, i32
  }
  func.func @transform_3(%arg0: i32, %arg1: i32) -> (i32, i32, i32, i32) {
    %c0_i32 = arith.constant 0 : i32
    %c0_i32_0 = arith.constant 0 : i32
    %c0_i32_1 = arith.constant 0 : i32
    return %arg0, %c0_i32, %arg1, %c0_i32_0 : i32, i32, i32, i32
  }
  func.func @transform_4(%arg0: i32, %arg1: i32) -> (i32, i32, i32, i32) {
    %c0_i32 = arith.constant 0 : i32
    %c0_i32_0 = arith.constant 0 : i32
    %c0_i32_1 = arith.constant 0 : i32
    return %arg0, %c0_i32, %arg1, %c0_i32_0 : i32, i32, i32, i32
  }
  func.func @transform_5(%arg0: i32, %arg1: i32) -> (i32, i32, i32, i32) {
    %c0_i32 = arith.constant 0 : i32
    %c0_i32_0 = arith.constant 0 : i32
    %c0_i32_1 = arith.constant 0 : i32
    return %arg0, %c0_i32, %arg1, %c0_i32_0 : i32, i32, i32, i32
  }
}

</mosaic_0001>

<llo_original>
// kernel: tpu_custom_call.1
$region0: #{tpu_custom_call.1}
  #allocation0 [shape = 'u32[]', space=smem, size = 0x4, offset = 0x4, fixed_abs, tag = 'smem constant byte address 0x4 - core index']
  #allocation1 [shape = 'u32[144,128]{1,0:T(1,128)}', space=vmem, size = 0x12000, scoped, tag = 'internal scratch']
  %s0 = inlined_call_operand.vmem [shape: f32[2,8,32], index: 0, kind: input, shape index: {}]
  %s1 = inlined_call_operand.vmem [shape: f32[96,32], index: 1, kind: input, shape index: {}]
  %s2 = inlined_call_operand.vmem [shape: f32[1,96], index: 2, kind: input, shape index: {}]
  %s3 = inlined_call_operand.hbm [shape: f32[2,4,8,8], index: 3, kind: output, shape index: {0}]
  %s4 = inlined_call_operand.hbm [shape: f32[2,4,8,8], index: 4, kind: output, shape index: {1}]
  %s5 = inlined_call_operand.hbm [shape: f32[2,4,8,8], index: 5, kind: output, shape index: {2}]
  %6 = xla_tuple %s3, %s4, %s5
  %s7 = sld [smem:[#allocation0]]
  $region61: #{tpu_custom_call.1} parent=0
    _
  %s9 = ssub.s32 1, %s7
  %s10 = scalar_select 0, %s9, %s7
  $region1: #{tpu_custom_call.1} parent=0
    #allocation2 [shape = 'u8[32768]{0}', space=vmem, size = 0x8000, scoped, tag = 'output window, operand 0']
    #allocation3 [shape = 's32[2]{0}', space=sflag, size = 0x8, scoped, tag = 'scoped memory for tpu_custom_call.1']
    #allocation4 [shape = 'u8[32768]{0}', space=vmem, size = 0x8000, scoped, tag = 'output window, operand 1']
    #allocation5 [shape = 's32[2]{0}', space=sflag, size = 0x8, scoped, tag = 'scoped memory for tpu_custom_call.1']
    #allocation6 [shape = 'u8[32768]{0}', space=vmem, size = 0x8000, scoped, tag = 'output window, operand 2']
    %11 = vsyncpa [#allocation3], 0
    %s12 = scalar_lea.sflag [#allocation3], 1
    %13 = vsyncpa %s12, 0
    %14 = vsyncpa [#allocation5], 0
    %s15 = scalar_lea.sflag [#allocation5], 1
    %16 = vsyncpa %s15, 0
    loop: start=0, step=1, limit=4
    $region2: #{tpu_custom_call.1} parent=1 // loop_pre_header
      _
    $region3: #{tpu_custom_call.1} parent=1 // loop_header
      %s18 = sphi 0, %s22
      %p19 = scmp.ge.s32.totalorder %s18, 4
      %s25 = sphi 0, %s37
      %s26 = sphi 0, %s33
      %s27 = sphi 0, %s25
      %s28 = sphi 0, %s26
      %s29 = sphi 0, %s27
      %s30 = sphi 0, %s28
      %s42 = sphi 0, %s44
      %s45 = sphi 0, %s42
      %s46 = sphi 0, %s45
      %s62 = sphi 0, %s46
      %s66 = sphi 0, %s66
      %s68 = sphi 0, %s66
      %s69 = sphi 0, %s68
      %s83 = sphi 0, %s69
      %s87 = sphi 0, %s87
      %s89 = sphi 0, %s87
      %s90 = sphi 0, %s89
      %s104 = sphi 0, %s90
      %s112 = sphi 0, %s114
      %s115 = sphi 0, %s112
      %s116 = sphi 0, %s115
      %s132 = sphi 0, %s116
      %s140 = sphi 0, %s142
      %s143 = sphi 0, %s140
      %s144 = sphi 0, %s143
      %s160 = sphi 0, %s144
      %s168 = sphi 0, %s170
      %s171 = sphi 0, %s168
      %s172 = sphi 0, %s171
      %s188 = sphi 0, %s172
    $region4: #{tpu_custom_call.1} parent=1 // loop_header_branch
      %21 = sbr.rel (%p19) target = $region8
    $region5: #{tpu_custom_call.1} parent=1 // loop_body
      %s23 = ssub.s32 %s18, 1
      %s24 = ssub.s32 %s18, 2
      %s31 = sadd.s32 1, %s26
      %p32 = scmp.ge.s32.totalorder %s31, 1
      %s33 = scalar_select %p32, 0, %s31
      %s34 = sadd.s32 1, %s25
      %s35 = scalar_select %p32, %s34, %s25
      %p36 = scmp.ge.s32.totalorder %s35, 2
      %s37 = scalar_select %p36, 0, %s35
      %s38 = ssub.s32 %s25, %s37
      %s39 = ssub.s32 %s26, %s33
      %s40 = sor.u32 %s38, %s39
      %p41 = scmp.eq.s32.totalorder %s40, 0
      %s43 = sadd.s32 %s42, 1
      %s44 = scalar_select %p41, %s42, %s43
      %p47 = pneg %p41
      %p48 = scmp.eq.s32.totalorder %s18, 1
      %p49 = por %p47, %p48
      %p50 = scmp.ne.s32.totalorder %s42, %s45
      %p51 = scmp.eq.s32.totalorder %s18, 0
      %p52 = por %p50, %p51
      %p53 = scmp.ne.s32.totalorder %s42, %s45
      %p54 = scmp.eq.s32.totalorder %s23, 1
      %p55 = por %p53, %p54
      %p56 = scmp.ne.s32.totalorder %s45, %s46
      %p57 = scmp.eq.s32.totalorder %s23, 0
      %p58 = por %p56, %p57
      %p59 = scmp.ne.s32.totalorder %s45, %s46
      %p60 = scmp.eq.s32.totalorder %s24, 1
      %p61 = por %p59, %p60
      %p63 = scmp.ne.s32.totalorder %s46, %s62
      %p64 = scmp.eq.s32.totalorder %s24, 0
      %p65 = por %p63, %p64
      %s67 = sadd.s32 %s66, 1
      %p70 = scmp.eq.s32.totalorder %s18, 1
      %p71 = scmp.ne.s32.totalorder %s66, %s68
      %p72 = scmp.eq.s32.totalorder %s18, 0
      %p73 = por %p71, %p72
      %p74 = scmp.ne.s32.totalorder %s66, %s68
      %p75 = scmp.eq.s32.totalorder %s23, 1
      %p76 = por %p74, %p75
      %p77 = scmp.ne.s32.totalorder %s68, %s69
      %p78 = scmp.eq.s32.totalorder %s23, 0
      %p79 = por %p77, %p78
      %p80 = scmp.ne.s32.totalorder %s68, %s69
      %p81 = scmp.eq.s32.totalorder %s24, 1
      %p82 = por %p80, %p81
      %p84 = scmp.ne.s32.totalorder %s69, %s83
      %p85 = scmp.eq.s32.totalorder %s24, 0
      %p86 = por %p84, %p85
      %s88 = sadd.s32 %s87, 1
      %p91 = scmp.eq.s32.totalorder %s18, 1
      %p92 = scmp.ne.s32.totalorder %s87, %s89
      %p93 = scmp.eq.s32.totalorder %s18, 0
      %p94 = por %p92, %p93
      %p95 = scmp.ne.s32.totalorder %s87, %s89
      %p96 = scmp.eq.s32.totalorder %s23, 1
      %p97 = por %p95, %p96
      %p98 = scmp.ne.s32.totalorder %s89, %s90
      %p99 = scmp.eq.s32.totalorder %s23, 0
      %p100 = por %p98, %p99
      %p101 = scmp.ne.s32.totalorder %s89, %s90
      %p102 = scmp.eq.s32.totalorder %s24, 1
      %p103 = por %p101, %p102
      %p105 = scmp.ne.s32.totalorder %s90, %s104
      %p106 = scmp.eq.s32.totalorder %s24, 0
      %p107 = por %p105, %p106
      %s108 = ssub.s32 %s25, %s37
      %s109 = ssub.s32 %s26, %s33
      %s110 = sor.u32 %s108, %s109
      %p111 = scmp.eq.s32.totalorder %s110, 0
      %s113 = sadd.s32 %s112, 1
      %s114 = scalar_select %p111, %s112, %s113
      %p117 = pneg %p111
      %p118 = scmp.eq.s32.totalorder %s18, 1
      %p119 = por %p117, %p118
      %p120 = scmp.ne.s32.totalorder %s112, %s115
      %p121 = scmp.eq.s32.totalorder %s18, 0
      %p122 = por %p120, %p121
      %p123 = scmp.ne.s32.totalorder %s112, %s115
      %p124 = scmp.eq.s32.totalorder %s23, 1
      %p125 = por %p123, %p124
      %p126 = scmp.ne.s32.totalorder %s115, %s116
      %p127 = scmp.eq.s32.totalorder %s23, 0
      %p128 = por %p126, %p127
      %p129 = scmp.ne.s32.totalorder %s115, %s116
      %p130 = scmp.eq.s32.totalorder %s24, 1
      %p131 = por %p129, %p130
      %p133 = scmp.ne.s32.totalorder %s116, %s132
      %p134 = scmp.eq.s32.totalorder %s24, 0
      %p135 = por %p133, %p134
      %s136 = ssub.s32 %s25, %s37
      %s137 = ssub.s32 %s26, %s33
      %s138 = sor.u32 %s136, %s137
      %p139 = scmp.eq.s32.totalorder %s138, 0
      %s141 = sadd.s32 %s140, 1
      %s142 = scalar_select %p139, %s140, %s141
      %p145 = pneg %p139
      %p146 = scmp.eq.s32.totalorder %s18, 1
      %p147 = por %p145, %p146
      %p148 = scmp.ne.s32.totalorder %s140, %s143
      %p149 = scmp.eq.s32.totalorder %s18, 0
      %p150 = por %p148, %p149
      %p151 = scmp.ne.s32.totalorder %s140, %s143
      %p152 = scmp.eq.s32.totalorder %s23, 1
      %p153 = por %p151, %p152
      %p154 = scmp.ne.s32.totalorder %s143, %s144
      %p155 = scmp.eq.s32.totalorder %s23, 0
      %p156 = por %p154, %p155
      %p157 = scmp.ne.s32.totalorder %s143, %s144
      %p158 = scmp.eq.s32.totalorder %s24, 1
      %p159 = por %p157, %p158
      %p161 = scmp.ne.s32.totalorder %s144, %s160
      %p162 = scmp.eq.s32.totalorder %s24, 0
      %p163 = por %p161, %p162
      %s164 = ssub.s32 %s25, %s37
      %s165 = ssub.s32 %s26, %s33
      %s166 = sor.u32 %s164, %s165
      %p167 = scmp.eq.s32.totalorder %s166, 0
      %s169 = sadd.s32 %s168, 1
      %s170 = scalar_select %p167, %s168, %s169
      %p173 = pneg %p167
      %p174 = scmp.eq.s32.totalorder %s18, 1
      %p175 = por %p173, %p174
      %p176 = scmp.ne.s32.totalorder %s168, %s171
      %p177 = scmp.eq.s32.totalorder %s18, 0
      %p178 = por %p176, %p177
      %p179 = scmp.ne.s32.totalorder %s168, %s171
      %p180 = scmp.eq.s32.totalorder %s23, 1
      %p181 = por %p179, %p180
      %p182 = scmp.ne.s32.totalorder %s171, %s172
      %p183 = scmp.eq.s32.totalorder %s23, 0
      %p184 = por %p182, %p183
      %p185 = scmp.ne.s32.totalorder %s171, %s172
      %p186 = scmp.eq.s32.totalorder %s24, 1
      %p187 = por %p185, %p186
      %p189 = scmp.ne.s32.totalorder %s172, %s188
      %p190 = scmp.eq.s32.totalorder %s24, 0
      %p191 = por %p189, %p190
      %p192 = scmp.le.s32.totalorder 1, %s18
      %p193 = scmp.lt.s32.totalorder %s18, 3
      %p194 = pnand %p192, %p193
      %p195 = pneg %p194
      // Predicated region
      $region9: #{tpu_custom_call.1} parent=5 // pred_check
        _
      $region10: #{tpu_custom_call.1} parent=5 // pred_check_branch
        %197 = sbr.rel (%p194) target = $region12
      $region11: #{tpu_custom_call.1} parent=5 // pred_region
        %s198 = ssub.s32 %s18, 1
        // Predicated region
        $region13: #{tpu_custom_call.1} parent=11 // pred_check
          %p199 = pneg %p79
        $region14: #{tpu_custom_call.1} parent=11 // pred_check_branch
          %201 = sbr.rel (%p199) target = $region16
        $region15: #{tpu_custom_call.1} parent=11 // pred_region
          _
        $region16: #{tpu_custom_call.1} parent=11 // pred_fallthru
          _
        // Predicated region
        $region17: #{tpu_custom_call.1} parent=11 // pred_check
          %p202 = pneg %p100
        $region18: #{tpu_custom_call.1} parent=11 // pred_check_branch
          %204 = sbr.rel (%p202) target = $region20
        $region19: #{tpu_custom_call.1} parent=11 // pred_region
          _
        $region20: #{tpu_custom_call.1} parent=11 // pred_fallthru
          _
      $region12: #{tpu_custom_call.1} parent=5 // pred_fallthru
        _
      %p205 = scmp.lt.s32.totalorder %s18, 2
      // Predicated region
      $region21: #{tpu_custom_call.1} parent=5 // pred_check
        %p206 = pneg %p205
      $region22: #{tpu_custom_call.1} parent=5 // pred_check_branch
        %208 = sbr.rel (%p206) target = $region24
      $region23: #{tpu_custom_call.1} parent=5 // pred_region
        // Predicated region
        $region25: #{tpu_custom_call.1} parent=23 // pred_check
          %p209 = pneg %p52
        $region26: #{tpu_custom_call.1} parent=23 // pred_check_branch
          %211 = sbr.rel (%p209) target = $region28
        $region27: #{tpu_custom_call.1} parent=23 // pred_region
          %p212 = scmp.lt.s32.totalorder %s25, 1
          %s213 = scalar_select %p212, %s25, 1
          %p214 = scmp.lt.s32.totalorder %s26, 0
          %s215 = scalar_select %p214, %s26, 0
          %s216 = sadd.s32 %s215, %s213
          %s217 = smul.addr %s216, 8
          %s218 = scalar_lea.vmem %s0, %s217
        $region28: #{tpu_custom_call.1} parent=23 // pred_fallthru
          _
      $region24: #{tpu_custom_call.1} parent=5 // pred_fallthru
        _
      %p219 = scmp.le.s32.totalorder 1, %s18
      %p220 = scmp.lt.s32.totalorder %s18, 3
      %p221 = pnand %p219, %p220
      %p222 = pneg %p221
      // Predicated region
      $region29: #{tpu_custom_call.1} parent=5 // pred_check
        _
      $region30: #{tpu_custom_call.1} parent=5 // pred_check_branch
        %224 = sbr.rel (%p221) target = $region32
      $region31: #{tpu_custom_call.1} parent=5 // pred_region
        %s225 = ssub.s32 %s18, 1
        %p226 = scmp.lt.s32.totalorder %s27, 1
        %s227 = scalar_select %p226, %s27, 1
        %p228 = scmp.lt.s32.totalorder %s28, 0
        %s229 = scalar_select %p228, %s28, 0
        %s230 = sadd.s32 %s229, %s227
        %s231 = smul.addr %s230, 8
        %s232 = scalar_lea.vmem %s0, %s231
        %p233 = pneg %p58
        %p234 = pneg %p55
        %p235 = pneg %p79
        %p236 = pneg %p76
        %p237 = pneg %p100
        %p238 = pneg %p97
        %p239 = pneg %p128
        %p240 = pneg %p125
        %s241 = sand.u32 %s115, 1
        %s242 = scalar_lea.sflag [#allocation3], %s241
        %s243 = sand.u32 %s115, 1
        %s244 = smul.addr %s243, 32
        %s245 = scalar_lea.vmem [#allocation2], %s244
        %p246 = pneg %p156
        %p247 = pneg %p153
        %s248 = sand.u32 %s23, 1
        %s249 = scalar_lea.sflag [#allocation5], %s248
        %s250 = sand.u32 %s143, 1
        %s251 = smul.addr %s250, 32
        %s252 = scalar_lea.vmem [#allocation4], %s251
        %p253 = pneg %p184
        %p254 = pneg %p181
        %s255 = sand.u32 %s23, 1
        %s256 = scalar_lea.sflag [#allocation5], %s255
        %s257 = sand.u32 %s171, 1
        %s258 = smul.addr %s257, 32
        %s259 = scalar_lea.vmem [#allocation6], %s258
        %p260 = scmp.lt.s32.totalorder %s27, 1
        %s261 = scalar_select %p260, %s27, 1
        %p262 = scmp.lt.s32.totalorder %s28, 0
        %s263 = scalar_select %p262, %s28, 0
        %s264 = sadd.s32 %s263, %s261
        %s265 = smul.addr %s264, 8
        %s266 = scalar_lea.vmem %s0, %s265
        %v267 = vld [vmem:[%s266] sm:$0xff]
        %v268 = vld [vmem:[%s1] sm:$0xff]
        %v269 = vld [vmem:[%s1 + $0x8] sm:$0xff]
        %v270 = vld [vmem:[%s1 + $0x10] sm:$0xff]
        %v271 = vld [vmem:[%s1 + $0x18] sm:$0xff]
        %v272 = vld [vmem:[%s1 + $0x20] sm:$0xff]
        %v273 = vld [vmem:[%s1 + $0x28] sm:$0xff]
        %v274 = vld [vmem:[%s1 + $0x30] sm:$0xff]
        %v275 = vld [vmem:[%s1 + $0x38] sm:$0xff]
        %v276 = vld [vmem:[%s1 + $0x40] sm:$0xff]
        %v277 = vld [vmem:[%s1 + $0x48] sm:$0xff]
        %v278 = vld [vmem:[%s1 + $0x50] sm:$0xff]
        %v279 = vld [vmem:[%s1 + $0x58] sm:$0xff]
        %v280 = vld [vmem:[%s2] sm:$0x1]
        %v282 = vlaneseq
        %v283 = vshrl.u32 %v282, 7
        %v284 = vsub.s32 0, %v283
        %v285 = vrot.slane %v280, %v284
        %vm287 = vcmask 261120
        %v289 = vsel %vm287, %v267, 0
        %v292 = vsel %vm287, %v268, 0
        %v295 = vsel %vm287, %v269, 0
        %v298 = vsel %vm287, %v270, 0
        %v301 = vsel %vm287, %v271, 0
        %v304 = vsel %vm287, %v272, 0
        %v307 = vsel %vm287, %v273, 0
        %v310 = vsel %vm287, %v274, 0
        %v313 = vsel %vm287, %v275, 0
        %v316 = vsel %vm287, %v276, 0
        %v319 = vsel %vm287, %v277, 0
        %v322 = vsel %vm287, %v278, 0
        %v325 = vsel %vm287, %v279, 0
        %327 = vmatprep.subr.mxu0 0.0
        %328 = vmatpush1.xpose.msra.mxu0 0.0
        %329 = vmatprep.subr.mxu0 0.0
        %330 = vmatpush1.xpose.msra.mxu0 0.0
        %331 = vmatprep.subr.mxu0 0.0
        %332 = vmatpush1.xpose.msra.mxu0 0.0
        %333 = vmatprep.subr.mxu0 0.0
        %334 = vmatpush1.xpose.msra.mxu0 0.0
        %335 = vmatprep.subr.mxu0 0.0
        %336 = vmatpush1.xpose.msra.mxu0 %v325
        %337 = vmatprep.subr.mxu0 0.0
        %338 = vmatpush1.xpose.msra.mxu0 %v322
        %339 = vmatprep.subr.mxu0 0.0
        %340 = vmatpush1.xpose.msra.mxu0 %v319
        %341 = vmatprep.subr.mxu0 0.0
        %342 = vmatpush1.xpose.msra.mxu0 %v316
        %343 = vmatprep.subr.mxu0 0.0
        %344 = vmatpush1.xpose.msra.mxu0 %v313
        %345 = vmatprep.subr.mxu0 0.0
        %346 = vmatpush1.xpose.msra.mxu0 %v310
        %347 = vmatprep.subr.mxu0 0.0
        %348 = vmatpush1.xpose.msra.mxu0 %v307
        %349 = vmatprep.subr.mxu0 0.0
        %350 = vmatpush1.xpose.msra.mxu0 %v304
        %351 = vmatprep.subr.mxu0 0.0
        %352 = vmatpush1.xpose.msra.mxu0 %v301
        %353 = vmatprep.subr.mxu0 0.0
        %354 = vmatpush1.xpose.msra.mxu0 %v298
        %355 = vmatprep.subr.mxu0 0.0
        %356 = vmatpush1.xpose.msra.mxu0 %v295
        %357 = vmatprep.subr.mxu0 0.0
        %358 = vmatpush1.xpose.msra.mxu0 %v292
        %359 = vmatprep.subr.mxu0 0.0
        %360 = vmatpush2.xpose.msra.mxu0 0.0
        %361 = vmatprep.subr.mxu0 0.0
        %362 = vmatpush2.xpose.msra.mxu0 0.0
        %363 = vmatprep.subr.mxu0 0.0
        %364 = vmatpush2.xpose.msra.mxu0 0.0
        %365 = vmatprep.subr.mxu0 0.0
        %366 = vmatpush2.xpose.msra.mxu0 0.0
        %367 = vmatprep.subr.mxu0 0.0
        %368 = vmatpush2.xpose.msra.mxu0 0.0
        %369 = vmatprep.subr.mxu0 0.0
        %370 = vmatpush2.xpose.msra.mxu0 0.0
        %371 = vmatprep.subr.mxu0 0.0
        %372 = vmatpush2.xpose.msra.mxu0 0.0
        %373 = vmatprep.subr.mxu0 0.0
        %374 = vmatpush2.xpose.msra.mxu0 0.0
        %375 = vmatprep.subr.mxu0 0.0
        %376 = vmatpush2.xpose.msra.mxu0 0.0
        %377 = vmatprep.subr.mxu0 0.0
        %378 = vmatpush2.xpose.msra.mxu0 0.0
        %379 = vmatprep.subr.mxu0 0.0
        %380 = vmatpush2.xpose.msra.mxu0 0.0
        %381 = vmatprep.subr.mxu0 0.0
        %382 = vmatpush2.xpose.msra.mxu0 0.0
        %383 = vmatprep.subr.mxu0 0.0
        %384 = vmatpush2.xpose.msra.mxu0 0.0
        %385 = vmatprep.subr.mxu0 0.0
        %386 = vmatpush2.xpose.msra.mxu0 0.0
        %387 = vmatprep.subr.mxu0 0.0
        %388 = vmatpush2.xpose.msra.mxu0 0.0
        %389 = vmatprep.subr.mxu0 0.0
        %390 = vmatpush2.xpose.msra.mxu0 0.0
        %391 = vmatprep.mubr.f32.mxu0 0.0
        %392 = vmatmul.mubr.f32.gmra.mxu0 %v289
        %v393 = vpop.f32.mrf.mxu0
        %v394 = vadd.f32 %v285, %v393
        %v395 = vpop.f32.mrf.mxu0
        %396 = vdwg.mxu0
        %v397 = vmul.f32 %v394, 0.35355338
        %vm398 = vcmask 64512
        %399 = vst.msk [vmem:[%s245] sm:$0xff] %vm398, %v397
        %401 = vrot.lane.b32.xlu0 %v394, 96
        %v402 = vpop.permute.xlu0 %401
        %404 = vst.msk [vmem:[%s252] sm:$0xff] %vm398, %v402
        %405 = vrot.lane.b32.xlu0 %v394, 64
        %v406 = vpop.permute.xlu0 %405
        %408 = vst.msk [vmem:[%s259] sm:$0xff] %vm398, %v406
        %410 = vrot.lane.b32.xlu0 %v397, 120
        %v411 = vpop.permute.xlu0 %410
        %s413 = scalar_lea.vmem %s245, 8 [#allocation2]
        %414 = vst.msk [vmem:[%s413] sm:$0xff] %vm398, %v411
        %415 = vrot.lane.b32.xlu0 %v394, 88
        %v416 = vpop.permute.xlu0 %415
        %s418 = scalar_lea.vmem %s252, 8 [#allocation4]
        %419 = vst.msk [vmem:[%s418] sm:$0xff] %vm398, %v416
        %420 = vrot.lane.b32.xlu0 %v394, 56
        %v421 = vpop.permute.xlu0 %420
        %s423 = scalar_lea.vmem %s259, 8 [#allocation6]
        %424 = vst.msk [vmem:[%s423] sm:$0xff] %vm398, %v421
        %425 = vrot.lane.b32.xlu0 %v397, 112
        %v426 = vpop.permute.xlu0 %425
        %s428 = scalar_lea.vmem %s245, 16 [#allocation2]
        %429 = vst.msk [vmem:[%s428] sm:$0xff] %vm398, %v426
        %430 = vrot.lane.b32.xlu0 %v394, 80
        %v431 = vpop.permute.xlu0 %430
        %s433 = scalar_lea.vmem %s252, 16 [#allocation4]
        %434 = vst.msk [vmem:[%s433] sm:$0xff] %vm398, %v431
        %435 = vrot.lane.b32.xlu0 %v394, 48
        %v436 = vpop.permute.xlu0 %435
        %s438 = scalar_lea.vmem %s259, 16 [#allocation6]
        %439 = vst.msk [vmem:[%s438] sm:$0xff] %vm398, %v436
        %440 = vrot.lane.b32.xlu0 %v397, 104
        %v441 = vpop.permute.xlu0 %440
        %s443 = scalar_lea.vmem %s245, 24 [#allocation2]
        %444 = vst.msk [vmem:[%s443] sm:$0xff] %vm398, %v441
        %445 = vrot.lane.b32.xlu0 %v394, 72
        %v446 = vpop.permute.xlu0 %445
        %s448 = scalar_lea.vmem %s252, 24 [#allocation4]
        %449 = vst.msk [vmem:[%s448] sm:$0xff] %vm398, %v446
        %450 = vrot.lane.b32.xlu0 %v394, 40
        %v451 = vpop.permute.xlu0 %450
        %s453 = scalar_lea.vmem %s259, 24 [#allocation6]
        %454 = vst.msk [vmem:[%s453] sm:$0xff] %vm398, %v451
        %s455 = sand.u32 %s115, 1
        %s456 = scalar_lea.sflag [#allocation3], %s455
        %s457 = sand.u32 %s115, 1
        %s458 = smul.addr %s457, 32
        %s459 = scalar_lea.vmem [#allocation2], %s458
        %s460 = sand.u32 %s23, 1
        %s461 = scalar_lea.sflag [#allocation5], %s460
        %s462 = sand.u32 %s143, 1
        %s463 = smul.addr %s462, 32
        %s464 = scalar_lea.vmem [#allocation4], %s463
        %s465 = sand.u32 %s23, 1
        %s466 = scalar_lea.sflag [#allocation5], %s465
        %s467 = sand.u32 %s171, 1
        %s468 = smul.addr %s467, 32
        %s469 = scalar_lea.vmem [#allocation6], %s468
        // Predicated region
        $region33: #{tpu_custom_call.1} parent=31 // pred_check
          %p470 = pneg %p125
        $region34: #{tpu_custom_call.1} parent=31 // pred_check_branch
          %472 = sbr.rel (%p470) target = $region36
        $region35: #{tpu_custom_call.1} parent=31 // pred_region
          %s474 = ssub.s32 512, 512
          %475 = vsyncadd %s456, %s474
          %s476 = smul.addr %s27, 4
          %s477 = sadd.s32 %s28, %s476
          %s478 = smul.addr %s477, 128
          %s479 = scalar_lea.hbm %s3, %s478
          %s480 = sshll.u32 %s459, 4
          %s481 = int_to_ptr.vmem [resolvable:$true] %s480
          %486 = dma.vmem_to_hbm [thread:$0]  %s481, 512, %s479, %s456, 128, 128, 8
        $region36: #{tpu_custom_call.1} parent=31 // pred_fallthru
          _
        // Predicated region
        $region37: #{tpu_custom_call.1} parent=31 // pred_check
          %p487 = pneg %p153
        $region38: #{tpu_custom_call.1} parent=31 // pred_check_branch
          %489 = sbr.rel (%p487) target = $region40
        $region39: #{tpu_custom_call.1} parent=31 // pred_region
          %s491 = ssub.s32 512, 512
          %492 = vsyncadd %s461, %s491
          %s493 = smul.addr %s27, 4
          %s494 = sadd.s32 %s28, %s493
          %s495 = smul.addr %s494, 128
          %s496 = scalar_lea.hbm %s4, %s495
          %s497 = sshll.u32 %s464, 4
          %s498 = int_to_ptr.vmem [resolvable:$true] %s497
          %503 = dma.vmem_to_hbm [thread:$0]  %s498, 512, %s496, %s461, 128, 128, 8
        $region40: #{tpu_custom_call.1} parent=31 // pred_fallthru
          _
        // Predicated region
        $region41: #{tpu_custom_call.1} parent=31 // pred_check
          %p504 = pneg %p181
        $region42: #{tpu_custom_call.1} parent=31 // pred_check_branch
          %506 = sbr.rel (%p504) target = $region44
        $region43: #{tpu_custom_call.1} parent=31 // pred_region
          %s508 = ssub.s32 512, 512
          %509 = vsyncadd %s466, %s508
          %s510 = smul.addr %s27, 4
          %s511 = sadd.s32 %s28, %s510
          %s512 = smul.addr %s511, 128
          %s513 = scalar_lea.hbm %s5, %s512
          %s514 = sshll.u32 %s469, 4
          %s515 = int_to_ptr.vmem [resolvable:$true] %s514
          %520 = dma.vmem_to_hbm [thread:$0]  %s515, 512, %s513, %s466, 128, 128, 8
        $region44: #{tpu_custom_call.1} parent=31 // pred_fallthru
          _
      $region32: #{tpu_custom_call.1} parent=5 // pred_fallthru
        _
      %p521 = scmp.le.s32.totalorder 2, %s18
      // Predicated region
      $region45: #{tpu_custom_call.1} parent=5 // pred_check
        %p522 = pneg %p521
      $region46: #{tpu_custom_call.1} parent=5 // pred_check_branch
        %524 = sbr.rel (%p522) target = $region48
      $region47: #{tpu_custom_call.1} parent=5 // pred_region
        %s525 = ssub.s32 %s18, 2
        // Predicated region
        $region49: #{tpu_custom_call.1} parent=47 // pred_check
          %p526 = pneg %p131
        $region50: #{tpu_custom_call.1} parent=47 // pred_check_branch
          %528 = sbr.rel (%p526) target = $region52
        $region51: #{tpu_custom_call.1} parent=47 // pred_region
          %s529 = sand.u32 %s116, 1
          %s530 = scalar_lea.sflag [#allocation3], %s529
          %s531 = sand.u32 %s116, 1
          %s532 = smul.addr %s531, 32
          %s533 = scalar_lea.vmem [#allocation2], %s532
          %534 = dma.done %s530, 512
        $region52: #{tpu_custom_call.1} parent=47 // pred_fallthru
          _
        // Predicated region
        $region53: #{tpu_custom_call.1} parent=47 // pred_check
          %p535 = pneg %p159
        $region54: #{tpu_custom_call.1} parent=47 // pred_check_branch
          %537 = sbr.rel (%p535) target = $region56
        $region55: #{tpu_custom_call.1} parent=47 // pred_region
          %s538 = sand.u32 %s24, 1
          %s539 = scalar_lea.sflag [#allocation5], %s538
          %s540 = sand.u32 %s144, 1
          %s541 = smul.addr %s540, 32
          %s542 = scalar_lea.vmem [#allocation4], %s541
          %543 = dma.done %s539, 512
        $region56: #{tpu_custom_call.1} parent=47 // pred_fallthru
          _
        // Predicated region
        $region57: #{tpu_custom_call.1} parent=47 // pred_check
          %p544 = pneg %p187
        $region58: #{tpu_custom_call.1} parent=47 // pred_check_branch
          %546 = sbr.rel (%p544) target = $region60
        $region59: #{tpu_custom_call.1} parent=47 // pred_region
          %s547 = sand.u32 %s24, 1
          %s548 = scalar_lea.sflag [#allocation5], %s547
          %s549 = sand.u32 %s172, 1
          %s550 = smul.addr %s549, 32
          %s551 = scalar_lea.vmem [#allocation6], %s550
          %552 = dma.done %s548, 512
        $region60: #{tpu_custom_call.1} parent=47 // pred_fallthru
          _
      $region48: #{tpu_custom_call.1} parent=5 // pred_fallthru
        _
    $region6: #{tpu_custom_call.1} parent=1 // loop_footer
      %s22 = sadd.s32 1, %s18
    $region7: #{tpu_custom_call.1} parent=1 // loop_footer_branch
      %17 = sbr.rel target = $region3
    $region8: #{tpu_custom_call.1} parent=1 // loop_exit
      _
    %553 = vsyncpa [#allocation3], 1
    %s554 = scalar_lea.sflag [#allocation3], 1
    %555 = vsyncpa %s554, 1
    %556 = vsyncpa [#allocation5], 1
    %s557 = scalar_lea.sflag [#allocation5], 1
    %558 = vsyncpa %s557, 1

</llo_original>
